<compile_context>
chip_gen: v6e
topology: v6e:2x2x1
jax: 0.10.0
libtpu: 0.0.40
codegen_flags: <defaults>
</compile_context>

<pallas_src>
import functools

import jax
import jax.numpy as jnp
from jax.experimental import pallas as pl
from jax.experimental.pallas import tpu as pltpu


def _round_up(x, m):
    return ((x + m - 1) // m) * m


def _make_fm_kernel(num_fields: int, emb_dim: int):
    """Kernel closure over static (F, D)."""

    def fm_kernel(femb_ref, linb_ref, out_ref):
        # femb_ref: (tb, F*D)  flattened field embeddings
        # linb_ref: (tb, 1)    pre-reduced linear term + bias
        # out_ref:  (tb, D)
        fe = femb_ref[...].astype(jnp.float32)                   # (tb, F*D)

        # Unrolled single-pass accumulation over the F lane slices of width D:
        #   s  = sum_f e_f        s2 = sum_f e_f * e_f
        s = fe[:, 0:emb_dim]
        s2 = s * s
        for f in range(1, num_fields):
            e = fe[:, f * emb_dim:(f + 1) * emb_dim]
            s = s + e
            s2 = s2 + e * e

        interaction = (s * s - s2) * 0.5                         # (tb, D)
        lin_bias = linb_ref[...].astype(jnp.float32)             # (tb, 1), broadcasts
        out_ref[...] = (interaction + lin_bias).astype(out_ref.dtype)

    return fm_kernel


@functools.partial(jax.jit, static_argnames=("tb",))
def fm_forward(feature_emb, linear_terms, bias, *, tb=1024):
    """FM forward.

    feature_emb:  (B, F, D) f32 or bf16
    linear_terms: (B, F)    f32   (per-field 1-dim embedding lookups)
    bias:         (1,)      f32
    returns:      (B, D)    f32
    """
    B, F, D = feature_emb.shape
    FD = F * D

    # ---- wrapper-side layout / pre-reduction (fuses into XLA, no extra kernel) ----
    fe2d = feature_emb.reshape(B, FD)                            # free contiguous reshape
    lin_plus_bias = (jnp.sum(linear_terms.astype(jnp.float32), axis=1, keepdims=True)
                     + bias.reshape(1, 1).astype(jnp.float32))   # (B, 1)

    # Batch tile: primary perf knob.  Keep it a multiple of 8 sublanes; pad B up.
    tb = max(8, min(tb, _round_up(B, 8)))
    tb = _round_up(tb, 8)
    Bp = _round_up(B, tb)
    if Bp != B:
        fe2d = jnp.pad(fe2d, ((0, Bp - B), (0, 0)))
        lin_plus_bias = jnp.pad(lin_plus_bias, ((0, Bp - B), (0, 0)))

    grid = (Bp // tb,)

    # VMEM footprint per step (f32): 2*(tb*FD) + 2*(tb*1) + 2*(tb*D) words.
    # Default tb=1024, FD=160 -> ~1.5 MiB: fits every generation's scoped default.
    # For tb >= ~8192 raise vmem_limit_bytes via pltpu.CompilerParams.
    out = pl.pallas_call(
        _make_fm_kernel(F, D),
        out_shape=jax.ShapeDtypeStruct((Bp, D), jnp.float32),
        grid_spec=pltpu.PrefetchScalarGridSpec(
            num_scalar_prefetch=0,
            grid=grid,
            in_specs=[
                pl.BlockSpec((tb, FD), lambda i: (i, 0)),   # flattened feature_emb
                pl.BlockSpec((tb, 1), lambda i: (i, 0)),    # linear + bias, pre-reduced
            ],
            out_specs=pl.BlockSpec((tb, D), lambda i: (i, 0)),
        ),
        compiler_params=pltpu.CompilerParams(
            dimension_semantics=("parallel",)),
    )(fe2d, lin_plus_bias)

    return out[:B]


def reference_fm(feature_emb, linear_terms, bias):
    square_of_sum = jnp.sum(feature_emb, axis=1) ** 2
    sum_of_square = jnp.sum(feature_emb ** 2, axis=1)
    interaction = (square_of_sum - sum_of_square) * 0.5
    additioned = jnp.sum(linear_terms, axis=1, keepdims=True) + bias
    return interaction + additioned


if __name__ == "__main__":
    key = jax.random.PRNGKey(0)

    # Module config: category_list with per-field vocab sizes; bias_yn=True.
    category_vocab_sizes = [7, 11, 5, 13, 9, 6, 4, 8, 10, 12]  # 10 categorical fields
    F = len(category_vocab_sizes)
    B = 256      # batch (so the grid has 2 steps with tb=128 -> both TCs busy on v7x)
    D = 16       # embedding dim of feature_emb (second forward arg)

    k_emb, k_x, k_tabs = jax.random.split(key, 3)

    # feature_emb input: (B, F, D)
    feature_emb = jax.random.normal(k_emb, (B, F, D), dtype=jnp.float32)

    # Categorical index input x: (B, F), each column bounded by its field's vocab.
    maxvals = jnp.array(category_vocab_sizes, dtype=jnp.int32)
    u = jax.random.uniform(k_x, (B, F))
    x = jnp.minimum((u * maxvals[None, :]).astype(jnp.int32), maxvals[None, :] - 1)

    # LogisticEmbeddingDict(category_list, 1): one (vocab_f, 1) table per field.
    # Ragged per-field gather stays in plain-JAX glue (it fuses with the wrapper
    # pre-reduction); the FM math runs in the Pallas kernel.
    table_keys = jax.random.split(k_tabs, F)
    tables = [0.01 * jax.random.normal(table_keys[f], (category_vocab_sizes[f], 1),
                                       dtype=jnp.float32)
              for f in range(F)]
    linear_terms = jnp.stack(
        [tables[f][x[:, f], 0] for f in range(F)], axis=1)       # (B, F)

    # bias = nn.Parameter(torch.zeros(1))
    bias = jnp.zeros((1,), dtype=jnp.float32)

    out = fm_forward(feature_emb, linear_terms, bias, tb=128)
    out = jax.block_until_ready(out)

    ref = reference_fm(feature_emb, linear_terms, bias)
    assert out.shape == (B, D)
    assert jnp.allclose(out, ref, atol=1e-5, rtol=1e-5)

    print("KERNEL_OK")
</pallas_src>

<mosaic_0001>
module attributes {stable_mosaic.version = 11 : i64} {
  func.func @fm_kernel(%arg0: i32, %arg1: memref<128x160xf32, #tpu.memory_space<vmem>>, %arg2: memref<128x1xf32, #tpu.memory_space<vmem>>, %arg3: memref<128x16xf32, #tpu.memory_space<vmem>>) attributes {dimension_semantics = [#tpu.dimension_semantics<parallel>], iteration_bounds = array<i64: 2>, scalar_prefetch = 0 : i64, scratch_operands = 0 : i64, tpu.core_type = #tpu.core_type<tc>, window_params = [{transform_indices = @transform_0, window_bounds = array<i64: 128, 160>}, {transform_indices = @transform_1, window_bounds = array<i64: 128, 1>}, {transform_indices = @transform_2, window_bounds = array<i64: 128, 16>}]} {
    %c0 = arith.constant 0 : index
    %c0_0 = arith.constant 0 : index
    %0 = vector.load %arg1[%c0, %c0_0] : memref<128x160xf32, #tpu.memory_space<vmem>>, vector<128x160xf32>
    %1 = vector.extract_strided_slice %0 {offsets = [0, 0], sizes = [128, 16], strides = [1, 1]} : vector<128x160xf32> to vector<128x16xf32>
    %2 = arith.mulf %1, %1 : vector<128x16xf32>
    %3 = vector.extract_strided_slice %0 {offsets = [0, 16], sizes = [128, 16], strides = [1, 1]} : vector<128x160xf32> to vector<128x16xf32>
    %4 = arith.addf %1, %3 : vector<128x16xf32>
    %5 = arith.mulf %3, %3 : vector<128x16xf32>
    %6 = arith.addf %2, %5 : vector<128x16xf32>
    %7 = vector.extract_strided_slice %0 {offsets = [0, 32], sizes = [128, 16], strides = [1, 1]} : vector<128x160xf32> to vector<128x16xf32>
    %8 = arith.addf %4, %7 : vector<128x16xf32>
    %9 = arith.mulf %7, %7 : vector<128x16xf32>
    %10 = arith.addf %6, %9 : vector<128x16xf32>
    %11 = vector.extract_strided_slice %0 {offsets = [0, 48], sizes = [128, 16], strides = [1, 1]} : vector<128x160xf32> to vector<128x16xf32>
    %12 = arith.addf %8, %11 : vector<128x16xf32>
    %13 = arith.mulf %11, %11 : vector<128x16xf32>
    %14 = arith.addf %10, %13 : vector<128x16xf32>
    %15 = vector.extract_strided_slice %0 {offsets = [0, 64], sizes = [128, 16], strides = [1, 1]} : vector<128x160xf32> to vector<128x16xf32>
    %16 = arith.addf %12, %15 : vector<128x16xf32>
    %17 = arith.mulf %15, %15 : vector<128x16xf32>
    %18 = arith.addf %14, %17 : vector<128x16xf32>
    %19 = vector.extract_strided_slice %0 {offsets = [0, 80], sizes = [128, 16], strides = [1, 1]} : vector<128x160xf32> to vector<128x16xf32>
    %20 = arith.addf %16, %19 : vector<128x16xf32>
    %21 = arith.mulf %19, %19 : vector<128x16xf32>
    %22 = arith.addf %18, %21 : vector<128x16xf32>
    %23 = vector.extract_strided_slice %0 {offsets = [0, 96], sizes = [128, 16], strides = [1, 1]} : vector<128x160xf32> to vector<128x16xf32>
    %24 = arith.addf %20, %23 : vector<128x16xf32>
    %25 = arith.mulf %23, %23 : vector<128x16xf32>
    %26 = arith.addf %22, %25 : vector<128x16xf32>
    %27 = vector.extract_strided_slice %0 {offsets = [0, 112], sizes = [128, 16], strides = [1, 1]} : vector<128x160xf32> to vector<128x16xf32>
    %28 = arith.addf %24, %27 : vector<128x16xf32>
    %29 = arith.mulf %27, %27 : vector<128x16xf32>
    %30 = arith.addf %26, %29 : vector<128x16xf32>
    %31 = vector.extract_strided_slice %0 {offsets = [0, 128], sizes = [128, 16], strides = [1, 1]} : vector<128x160xf32> to vector<128x16xf32>
    %32 = arith.addf %28, %31 : vector<128x16xf32>
    %33 = arith.mulf %31, %31 : vector<128x16xf32>
    %34 = arith.addf %30, %33 : vector<128x16xf32>
    %35 = vector.extract_strided_slice %0 {offsets = [0, 144], sizes = [128, 16], strides = [1, 1]} : vector<128x160xf32> to vector<128x16xf32>
    %36 = arith.addf %32, %35 : vector<128x16xf32>
    %37 = arith.mulf %35, %35 : vector<128x16xf32>
    %38 = arith.addf %34, %37 : vector<128x16xf32>
    %39 = arith.mulf %36, %36 : vector<128x16xf32>
    %40 = arith.subf %39, %38 : vector<128x16xf32>
    %cst = arith.constant 5.000000e-01 : f32
    %41 = vector.broadcast %cst : f32 to vector<128x16xf32>
    %42 = arith.mulf %40, %41 : vector<128x16xf32>
    %c0_1 = arith.constant 0 : index
    %c0_2 = arith.constant 0 : index
    %43 = vector.load %arg2[%c0_1, %c0_2] : memref<128x1xf32, #tpu.memory_space<vmem>>, vector<128x1xf32>
    %44 = vector.broadcast %43 : vector<128x1xf32> to vector<128x16xf32>
    %45 = arith.addf %42, %44 : vector<128x16xf32>
    %c0_3 = arith.constant 0 : index
    %c0_4 = arith.constant 0 : index
    %46 = vector.load %arg3[%c0_3, %c0_4] : memref<128x16xf32, #tpu.memory_space<vmem>>, vector<128x16xf32>
    tpu.vector_store %arg3[%c0_3, %c0_4], %45 {strides = array<i32>} : memref<128x16xf32, #tpu.memory_space<vmem>>, vector<128x16xf32>,
    return
  }
  func.func @transform_0(%arg0: i32) -> (i32, i32) {
    %c0_i32 = arith.constant 0 : i32
    %c0_i32_0 = arith.constant 0 : i32
    return %arg0, %c0_i32 : i32, i32
  }
  func.func @transform_1(%arg0: i32) -> (i32, i32) {
    %c0_i32 = arith.constant 0 : i32
    %c0_i32_0 = arith.constant 0 : i32
    return %arg0, %c0_i32 : i32, i32
  }
  func.func @transform_2(%arg0: i32) -> (i32, i32) {
    %c0_i32 = arith.constant 0 : i32
    %c0_i32_0 = arith.constant 0 : i32
    return %arg0, %c0_i32 : i32, i32
  }
}

</mosaic_0001>

<llo_original>
// kernel: fm_forward.1
$region0: #{fm_forward.1}
  #allocation0 [shape = 'u32[]', space=smem, size = 0x4, offset = 0x4, fixed_abs, tag = 'smem constant byte address 0x4 - core index']
  #allocation1 [shape = 'u32[144,128]{1,0:T(1,128)}', space=vmem, size = 0x12000, scoped, tag = 'internal scratch']
  %s0 = inlined_call_operand.vmem [shape: f32[256,160], index: 0, kind: input, shape index: {}]
  %s1 = inlined_call_operand.vmem [shape: f32[256,1], index: 1, kind: input, shape index: {}]
  %s2 = inlined_call_operand.vmem [shape: f32[256,16], index: 2, kind: output, shape index: {}]
  %s3 = sld [smem:[#allocation0]]
  $region41: #{fm_forward.1} parent=0
    _
  %s5 = ssub.s32 1, %s3
  %s6 = scalar_select 0, %s5, %s3
  loop: start=0, step=1, limit=4
  $region2: #{fm_forward.1} parent=0 // loop_pre_header
    _
  $region3: #{fm_forward.1} parent=0 // loop_header
    %s8 = sphi 0, %s12
    %p9 = scmp.ge.s32.totalorder %s8, 4
    %s18 = sphi 0, %s20
    %s21 = sphi 0, %s18
    %s22 = sphi 0, %s21
    %s38 = sphi 0, %s22
    %s44 = sphi 0, %s46
    %s47 = sphi 0, %s44
    %s48 = sphi 0, %s47
    %s64 = sphi 0, %s48
    %s70 = sphi 0, %s72
    %s73 = sphi 0, %s70
    %s74 = sphi 0, %s73
    %s90 = sphi 0, %s74
  $region4: #{fm_forward.1} parent=0 // loop_header_branch
    %11 = sbr.rel (%p9) target = $region8
  $region5: #{fm_forward.1} parent=0 // loop_body
    %s13 = ssub.s32 %s8, 1
    %s14 = ssub.s32 %s8, 2
    %s15 = sadd.s32 %s8, 1
    %s16 = ssub.s32 %s8, %s15
    %p17 = scmp.eq.s32.totalorder %s16, 0
    %s19 = sadd.s32 %s18, 1
    %s20 = scalar_select %p17, %s18, %s19
    %p23 = pneg %p17
    %p24 = scmp.eq.s32.totalorder %s8, 1
    %p25 = por %p23, %p24
    %p26 = scmp.ne.s32.totalorder %s18, %s21
    %p27 = scmp.eq.s32.totalorder %s8, 0
    %p28 = por %p26, %p27
    %p29 = scmp.ne.s32.totalorder %s18, %s21
    %p30 = scmp.eq.s32.totalorder %s13, 1
    %p31 = por %p29, %p30
    %p32 = scmp.ne.s32.totalorder %s21, %s22
    %p33 = scmp.eq.s32.totalorder %s13, 0
    %p34 = por %p32, %p33
    %p35 = scmp.ne.s32.totalorder %s21, %s22
    %p36 = scmp.eq.s32.totalorder %s14, 1
    %p37 = por %p35, %p36
    %p39 = scmp.ne.s32.totalorder %s22, %s38
    %p40 = scmp.eq.s32.totalorder %s14, 0
    %p41 = por %p39, %p40
    %s42 = ssub.s32 %s8, %s15
    %p43 = scmp.eq.s32.totalorder %s42, 0
    %s45 = sadd.s32 %s44, 1
    %s46 = scalar_select %p43, %s44, %s45
    %p49 = pneg %p43
    %p50 = scmp.eq.s32.totalorder %s8, 1
    %p51 = por %p49, %p50
    %p52 = scmp.ne.s32.totalorder %s44, %s47
    %p53 = scmp.eq.s32.totalorder %s8, 0
    %p54 = por %p52, %p53
    %p55 = scmp.ne.s32.totalorder %s44, %s47
    %p56 = scmp.eq.s32.totalorder %s13, 1
    %p57 = por %p55, %p56
    %p58 = scmp.ne.s32.totalorder %s47, %s48
    %p59 = scmp.eq.s32.totalorder %s13, 0
    %p60 = por %p58, %p59
    %p61 = scmp.ne.s32.totalorder %s47, %s48
    %p62 = scmp.eq.s32.totalorder %s14, 1
    %p63 = por %p61, %p62
    %p65 = scmp.ne.s32.totalorder %s48, %s64
    %p66 = scmp.eq.s32.totalorder %s14, 0
    %p67 = por %p65, %p66
    %s68 = ssub.s32 %s8, %s15
    %p69 = scmp.eq.s32.totalorder %s68, 0
    %s71 = sadd.s32 %s70, 1
    %s72 = scalar_select %p69, %s70, %s71
    %p75 = pneg %p69
    %p76 = scmp.eq.s32.totalorder %s8, 1
    %p77 = por %p75, %p76
    %p78 = scmp.ne.s32.totalorder %s70, %s73
    %p79 = scmp.eq.s32.totalorder %s8, 0
    %p80 = por %p78, %p79
    %p81 = scmp.ne.s32.totalorder %s70, %s73
    %p82 = scmp.eq.s32.totalorder %s13, 1
    %p83 = por %p81, %p82
    %p84 = scmp.ne.s32.totalorder %s73, %s74
    %p85 = scmp.eq.s32.totalorder %s13, 0
    %p86 = por %p84, %p85
    %p87 = scmp.ne.s32.totalorder %s73, %s74
    %p88 = scmp.eq.s32.totalorder %s14, 1
    %p89 = por %p87, %p88
    %p91 = scmp.ne.s32.totalorder %s74, %s90
    %p92 = scmp.eq.s32.totalorder %s14, 0
    %p93 = por %p91, %p92
    %p94 = scmp.le.s32.totalorder 1, %s8
    %p95 = scmp.lt.s32.totalorder %s8, 3
    %p96 = pnand %p94, %p95
    %p97 = pneg %p96
    // Predicated region
    $region9: #{fm_forward.1} parent=5 // pred_check
      _
    $region10: #{fm_forward.1} parent=5 // pred_check_branch
      %99 = sbr.rel (%p96) target = $region12
    $region11: #{fm_forward.1} parent=5 // pred_region
      %s100 = ssub.s32 %s8, 1
    $region12: #{fm_forward.1} parent=5 // pred_fallthru
      _
    %p101 = scmp.lt.s32.totalorder %s8, 2
    // Predicated region
    $region13: #{fm_forward.1} parent=5 // pred_check
      %p102 = pneg %p101
    $region14: #{fm_forward.1} parent=5 // pred_check_branch
      %104 = sbr.rel (%p102) target = $region16
    $region15: #{fm_forward.1} parent=5 // pred_region
      // Predicated region
      $region17: #{fm_forward.1} parent=15 // pred_check
        %p105 = pneg %p28
      $region18: #{fm_forward.1} parent=15 // pred_check_branch
        %107 = sbr.rel (%p105) target = $region20
      $region19: #{fm_forward.1} parent=15 // pred_region
        %s108 = smul.u32 16, %s8
        %p109 = scmp.lt.s32.totalorder %s108, 31
        %s110 = scalar_select %p109, %s108, 31
        %s111 = smul.addr %s110, 2
        %s112 = smul.addr %s111, 8
        %s113 = scalar_lea.vmem %s0, %s112
        %s114 = smul.u32 16, %s8
      $region20: #{fm_forward.1} parent=15 // pred_fallthru
        _
      // Predicated region
      $region21: #{fm_forward.1} parent=15 // pred_check
        %p115 = pneg %p54
      $region22: #{fm_forward.1} parent=15 // pred_check_branch
        %117 = sbr.rel (%p115) target = $region24
      $region23: #{fm_forward.1} parent=15 // pred_region
        %s118 = smul.u32 16, %s8
        %p119 = scmp.lt.s32.totalorder %s118, 31
        %s120 = scalar_select %p119, %s118, 31
        %s121 = smul.addr %s120, 8
        %s122 = scalar_lea.vmem %s1, %s121
        %s123 = smul.u32 16, %s8
      $region24: #{fm_forward.1} parent=15 // pred_fallthru
        _
    $region16: #{fm_forward.1} parent=5 // pred_fallthru
      _
    %p124 = scmp.le.s32.totalorder 1, %s8
    %p125 = scmp.lt.s32.totalorder %s8, 3
    %p126 = pnand %p124, %p125
    %p127 = pneg %p126
    // Predicated region
    $region25: #{fm_forward.1} parent=5 // pred_check
      _
    $region26: #{fm_forward.1} parent=5 // pred_check_branch
      %129 = sbr.rel (%p126) target = $region28
    $region27: #{fm_forward.1} parent=5 // pred_region
      %s130 = ssub.s32 %s8, 1
      %s131 = smul.u32 16, %s13
      %p132 = scmp.lt.s32.totalorder %s131, 31
      %s133 = scalar_select %p132, %s131, 31
      %s134 = smul.addr %s133, 2
      %s135 = smul.addr %s134, 8
      %s136 = scalar_lea.vmem %s0, %s135
      %p137 = pneg %p34
      %p138 = pneg %p31
      %s139 = smul.u32 16, %s13
      %p140 = scmp.lt.s32.totalorder %s139, 31
      %s141 = scalar_select %p140, %s139, 31
      %s142 = smul.addr %s141, 8
      %s143 = scalar_lea.vmem %s1, %s142
      %p144 = pneg %p60
      %p145 = pneg %p57
      %p146 = pneg %p86
      %p147 = pneg %p83
      %s148 = smul.u32 16, %s13
      %p149 = scmp.lt.s32.totalorder %s148, 31
      %s150 = scalar_select %p149, %s148, 31
      %s151 = smul.addr %s150, 8
      %s152 = scalar_lea.vmem %s2, %s151
      %s153 = smul.u32 16, %s13
      %p154 = scmp.lt.s32.totalorder %s153, 31
      %s155 = scalar_select %p154, %s153, 31
      %s156 = smul.addr %s155, 2
      %s157 = smul.addr %s156, 8
      %s158 = scalar_lea.vmem %s0, %s157
      %s159 = smul.u32 16, %s13
      %s160 = smul.u32 16, %s13
      %p161 = scmp.lt.s32.totalorder %s160, 31
      %s162 = scalar_select %p161, %s160, 31
      %s163 = smul.addr %s162, 8
      %s164 = scalar_lea.vmem %s1, %s163
      %s165 = smul.u32 16, %s13
      %s166 = smul.u32 16, %s13
      %p167 = scmp.lt.s32.totalorder %s166, 31
      %s168 = scalar_select %p167, %s166, 31
      %s169 = smul.addr %s168, 8
      %s170 = scalar_lea.vmem %s2, %s169
      %s171 = smul.u32 16, %s13
      %v172 = vld [vmem:[%s158] sm:$0xff]
      %v173 = vld [vmem:[%s158 + $0x8] sm:$0xff]
      %v174 = vld [vmem:[%s158 + $0x10] sm:$0xff]
      %v175 = vld [vmem:[%s158 + $0x18] sm:$0xff]
      %v176 = vld [vmem:[%s158 + $0x20] sm:$0xff]
      %v177 = vld [vmem:[%s158 + $0x28] sm:$0xff]
      %v178 = vld [vmem:[%s158 + $0x30] sm:$0xff]
      %v179 = vld [vmem:[%s158 + $0x38] sm:$0xff]
      %v180 = vld [vmem:[%s158 + $0x40] sm:$0xff]
      %v181 = vld [vmem:[%s158 + $0x48] sm:$0xff]
      %v182 = vld [vmem:[%s158 + $0x50] sm:$0xff]
      %v183 = vld [vmem:[%s158 + $0x58] sm:$0xff]
      %v184 = vld [vmem:[%s158 + $0x60] sm:$0xff]
      %v185 = vld [vmem:[%s158 + $0x68] sm:$0xff]
      %v186 = vld [vmem:[%s158 + $0x70] sm:$0xff]
      %v187 = vld [vmem:[%s158 + $0x78] sm:$0xff]
      %v188 = vld [vmem:[%s158 + $0x80] sm:$0xff]
      %v189 = vld [vmem:[%s158 + $0x88] sm:$0xff]
      %v190 = vld [vmem:[%s158 + $0x90] sm:$0xff]
      %v191 = vld [vmem:[%s158 + $0x98] sm:$0xff]
      %v192 = vld [vmem:[%s158 + $0xa0] sm:$0xff]
      %v193 = vld [vmem:[%s158 + $0xa8] sm:$0xff]
      %v194 = vld [vmem:[%s158 + $0xb0] sm:$0xff]
      %v195 = vld [vmem:[%s158 + $0xb8] sm:$0xff]
      %v196 = vld [vmem:[%s158 + $0xc0] sm:$0xff]
      %v197 = vld [vmem:[%s158 + $0xc8] sm:$0xff]
      %v198 = vld [vmem:[%s158 + $0xd0] sm:$0xff]
      %v199 = vld [vmem:[%s158 + $0xd8] sm:$0xff]
      %v200 = vld [vmem:[%s158 + $0xe0] sm:$0xff]
      %v201 = vld [vmem:[%s158 + $0xe8] sm:$0xff]
      %v202 = vld [vmem:[%s158 + $0xf0] sm:$0xff]
      %v203 = vld [vmem:[%s158 + $0xf8] sm:$0xff]
      %v204 = vmul.f32 %v172, %v172
      %v205 = vmul.f32 %v174, %v174
      %v206 = vmul.f32 %v176, %v176
      %v207 = vmul.f32 %v178, %v178
      %v208 = vmul.f32 %v180, %v180
      %v209 = vmul.f32 %v182, %v182
      %v210 = vmul.f32 %v184, %v184
      %v211 = vmul.f32 %v186, %v186
      %v212 = vmul.f32 %v188, %v188
      %v213 = vmul.f32 %v190, %v190
      %v214 = vmul.f32 %v192, %v192
      %v215 = vmul.f32 %v194, %v194
      %v216 = vmul.f32 %v196, %v196
      %v217 = vmul.f32 %v198, %v198
      %v218 = vmul.f32 %v200, %v200
      %v219 = vmul.f32 %v202, %v202
      %236 = vrot.lane.b32.xlu0 %v172, 112
      %v237 = vpop.permute.xlu0 %236
      %238 = vrot.lane.b32.xlu0 %v174, 112
      %v239 = vpop.permute.xlu0 %238
      %240 = vrot.lane.b32.xlu0 %v176, 112
      %v241 = vpop.permute.xlu0 %240
      %242 = vrot.lane.b32.xlu0 %v178, 112
      %v243 = vpop.permute.xlu0 %242
      %244 = vrot.lane.b32.xlu0 %v180, 112
      %v245 = vpop.permute.xlu0 %244
      %246 = vrot.lane.b32.xlu0 %v182, 112
      %v247 = vpop.permute.xlu0 %246
      %248 = vrot.lane.b32.xlu0 %v184, 112
      %v249 = vpop.permute.xlu0 %248
      %250 = vrot.lane.b32.xlu0 %v186, 112
      %v251 = vpop.permute.xlu0 %250
      %252 = vrot.lane.b32.xlu0 %v188, 112
      %v253 = vpop.permute.xlu0 %252
      %254 = vrot.lane.b32.xlu0 %v190, 112
      %v255 = vpop.permute.xlu0 %254
      %256 = vrot.lane.b32.xlu0 %v192, 112
      %v257 = vpop.permute.xlu0 %256
      %258 = vrot.lane.b32.xlu0 %v194, 112
      %v259 = vpop.permute.xlu0 %258
      %260 = vrot.lane.b32.xlu0 %v196, 112
      %v261 = vpop.permute.xlu0 %260
      %262 = vrot.lane.b32.xlu0 %v198, 112
      %v263 = vpop.permute.xlu0 %262
      %264 = vrot.lane.b32.xlu0 %v200, 112
      %v265 = vpop.permute.xlu0 %264
      %266 = vrot.lane.b32.xlu0 %v202, 112
      %v267 = vpop.permute.xlu0 %266
      %v284 = vadd.f32 %v172, %v237
      %v285 = vadd.f32 %v174, %v239
      %v286 = vadd.f32 %v176, %v241
      %v287 = vadd.f32 %v178, %v243
      %v288 = vadd.f32 %v180, %v245
      %v289 = vadd.f32 %v182, %v247
      %v290 = vadd.f32 %v184, %v249
      %v291 = vadd.f32 %v186, %v251
      %v292 = vadd.f32 %v188, %v253
      %v293 = vadd.f32 %v190, %v255
      %v294 = vadd.f32 %v192, %v257
      %v295 = vadd.f32 %v194, %v259
      %v296 = vadd.f32 %v196, %v261
      %v297 = vadd.f32 %v198, %v263
      %v298 = vadd.f32 %v200, %v265
      %v299 = vadd.f32 %v202, %v267
      %316 = vrot.lane.b32.xlu0 %v204, 112
      %v317 = vpop.permute.xlu0 %316
      %318 = vrot.lane.b32.xlu0 %v205, 112
      %v319 = vpop.permute.xlu0 %318
      %320 = vrot.lane.b32.xlu0 %v206, 112
      %v321 = vpop.permute.xlu0 %320
      %322 = vrot.lane.b32.xlu0 %v207, 112
      %v323 = vpop.permute.xlu0 %322
      %324 = vrot.lane.b32.xlu0 %v208, 112
      %v325 = vpop.permute.xlu0 %324
      %326 = vrot.lane.b32.xlu0 %v209, 112
      %v327 = vpop.permute.xlu0 %326
      %328 = vrot.lane.b32.xlu0 %v210, 112
      %v329 = vpop.permute.xlu0 %328
      %330 = vrot.lane.b32.xlu0 %v211, 112
      %v331 = vpop.permute.xlu0 %330
      %332 = vrot.lane.b32.xlu0 %v212, 112
      %v333 = vpop.permute.xlu0 %332
      %334 = vrot.lane.b32.xlu0 %v213, 112
      %v335 = vpop.permute.xlu0 %334
      %336 = vrot.lane.b32.xlu0 %v214, 112
      %v337 = vpop.permute.xlu0 %336
      %338 = vrot.lane.b32.xlu0 %v215, 112
      %v339 = vpop.permute.xlu0 %338
      %340 = vrot.lane.b32.xlu0 %v216, 112
      %v341 = vpop.permute.xlu0 %340
      %342 = vrot.lane.b32.xlu0 %v217, 112
      %v343 = vpop.permute.xlu0 %342
      %344 = vrot.lane.b32.xlu0 %v218, 112
      %v345 = vpop.permute.xlu0 %344
      %346 = vrot.lane.b32.xlu0 %v219, 112
      %v347 = vpop.permute.xlu0 %346
      %v364 = vadd.f32 %v204, %v317
      %v365 = vadd.f32 %v205, %v319
      %v366 = vadd.f32 %v206, %v321
      %v367 = vadd.f32 %v207, %v323
      %v368 = vadd.f32 %v208, %v325
      %v369 = vadd.f32 %v209, %v327
      %v370 = vadd.f32 %v210, %v329
      %v371 = vadd.f32 %v211, %v331
      %v372 = vadd.f32 %v212, %v333
      %v373 = vadd.f32 %v213, %v335
      %v374 = vadd.f32 %v214, %v337
      %v375 = vadd.f32 %v215, %v339
      %v376 = vadd.f32 %v216, %v341
      %v377 = vadd.f32 %v217, %v343
      %v378 = vadd.f32 %v218, %v345
      %v379 = vadd.f32 %v219, %v347
      %380 = vrot.lane.b32.xlu0 %v172, 96
      %v381 = vpop.permute.xlu0 %380
      %382 = vrot.lane.b32.xlu0 %v174, 96
      %v383 = vpop.permute.xlu0 %382
      %384 = vrot.lane.b32.xlu0 %v176, 96
      %v385 = vpop.permute.xlu0 %384
      %386 = vrot.lane.b32.xlu0 %v178, 96
      %v387 = vpop.permute.xlu0 %386
      %388 = vrot.lane.b32.xlu0 %v180, 96
      %v389 = vpop.permute.xlu0 %388
      %390 = vrot.lane.b32.xlu0 %v182, 96
      %v391 = vpop.permute.xlu0 %390
      %392 = vrot.lane.b32.xlu0 %v184, 96
      %v393 = vpop.permute.xlu0 %392
      %394 = vrot.lane.b32.xlu0 %v186, 96
      %v395 = vpop.permute.xlu0 %394
      %396 = vrot.lane.b32.xlu0 %v188, 96
      %v397 = vpop.permute.xlu0 %396
      %398 = vrot.lane.b32.xlu0 %v190, 96
      %v399 = vpop.permute.xlu0 %398
      %400 = vrot.lane.b32.xlu0 %v192, 96
      %v401 = vpop.permute.xlu0 %400
      %402 = vrot.lane.b32.xlu0 %v194, 96
      %v403 = vpop.permute.xlu0 %402
      %404 = vrot.lane.b32.xlu0 %v196, 96
      %v405 = vpop.permute.xlu0 %404
      %406 = vrot.lane.b32.xlu0 %v198, 96
      %v407 = vpop.permute.xlu0 %406
      %408 = vrot.lane.b32.xlu0 %v200, 96
      %v409 = vpop.permute.xlu0 %408
      %410 = vrot.lane.b32.xlu0 %v202, 96
      %v411 = vpop.permute.xlu0 %410
      %v428 = vadd.f32 %v284, %v381
      %v429 = vadd.f32 %v285, %v383
      %v430 = vadd.f32 %v286, %v385
      %v431 = vadd.f32 %v287, %v387
      %v432 = vadd.f32 %v288, %v389
      %v433 = vadd.f32 %v289, %v391
      %v434 = vadd.f32 %v290, %v393
      %v435 = vadd.f32 %v291, %v395
      %v436 = vadd.f32 %v292, %v397
      %v437 = vadd.f32 %v293, %v399
      %v438 = vadd.f32 %v294, %v401
      %v439 = vadd.f32 %v295, %v403
      %v440 = vadd.f32 %v296, %v405
      %v441 = vadd.f32 %v297, %v407
      %v442 = vadd.f32 %v298, %v409
      %v443 = vadd.f32 %v299, %v411
      %444 = vrot.lane.b32.xlu0 %v204, 96
      %v445 = vpop.permute.xlu0 %444
      %446 = vrot.lane.b32.xlu0 %v205, 96
      %v447 = vpop.permute.xlu0 %446
      %448 = vrot.lane.b32.xlu0 %v206, 96
      %v449 = vpop.permute.xlu0 %448
      %450 = vrot.lane.b32.xlu0 %v207, 96
      %v451 = vpop.permute.xlu0 %450
      %452 = vrot.lane.b32.xlu0 %v208, 96
      %v453 = vpop.permute.xlu0 %452
      %454 = vrot.lane.b32.xlu0 %v209, 96
      %v455 = vpop.permute.xlu0 %454
      %456 = vrot.lane.b32.xlu0 %v210, 96
      %v457 = vpop.permute.xlu0 %456
      %458 = vrot.lane.b32.xlu0 %v211, 96
      %v459 = vpop.permute.xlu0 %458
      %460 = vrot.lane.b32.xlu0 %v212, 96
      %v461 = vpop.permute.xlu0 %460
      %462 = vrot.lane.b32.xlu0 %v213, 96
      %v463 = vpop.permute.xlu0 %462
      %464 = vrot.lane.b32.xlu0 %v214, 96
      %v465 = vpop.permute.xlu0 %464
      %466 = vrot.lane.b32.xlu0 %v215, 96
      %v467 = vpop.permute.xlu0 %466
      %468 = vrot.lane.b32.xlu0 %v216, 96
      %v469 = vpop.permute.xlu0 %468
      %470 = vrot.lane.b32.xlu0 %v217, 96
      %v471 = vpop.permute.xlu0 %470
      %472 = vrot.lane.b32.xlu0 %v218, 96
      %v473 = vpop.permute.xlu0 %472
      %474 = vrot.lane.b32.xlu0 %v219, 96
      %v475 = vpop.permute.xlu0 %474
      %v492 = vadd.f32 %v364, %v445
      %v493 = vadd.f32 %v365, %v447
      %v494 = vadd.f32 %v366, %v449
      %v495 = vadd.f32 %v367, %v451
      %v496 = vadd.f32 %v368, %v453
      %v497 = vadd.f32 %v369, %v455
      %v498 = vadd.f32 %v370, %v457
      %v499 = vadd.f32 %v371, %v459
      %v500 = vadd.f32 %v372, %v461
      %v501 = vadd.f32 %v373, %v463
      %v502 = vadd.f32 %v374, %v465
      %v503 = vadd.f32 %v375, %v467
      %v504 = vadd.f32 %v376, %v469
      %v505 = vadd.f32 %v377, %v471
      %v506 = vadd.f32 %v378, %v473
      %v507 = vadd.f32 %v379, %v475
      %508 = vrot.lane.b32.xlu0 %v172, 80
      %v509 = vpop.permute.xlu0 %508
      %510 = vrot.lane.b32.xlu0 %v174, 80
      %v511 = vpop.permute.xlu0 %510
      %512 = vrot.lane.b32.xlu0 %v176, 80
      %v513 = vpop.permute.xlu0 %512
      %514 = vrot.lane.b32.xlu0 %v178, 80
      %v515 = vpop.permute.xlu0 %514
      %516 = vrot.lane.b32.xlu0 %v180, 80
      %v517 = vpop.permute.xlu0 %516
      %518 = vrot.lane.b32.xlu0 %v182, 80
      %v519 = vpop.permute.xlu0 %518
      %520 = vrot.lane.b32.xlu0 %v184, 80
      %v521 = vpop.permute.xlu0 %520
      %522 = vrot.lane.b32.xlu0 %v186, 80
      %v523 = vpop.permute.xlu0 %522
      %524 = vrot.lane.b32.xlu0 %v188, 80
      %v525 = vpop.permute.xlu0 %524
      %526 = vrot.lane.b32.xlu0 %v190, 80
      %v527 = vpop.permute.xlu0 %526
      %528 = vrot.lane.b32.xlu0 %v192, 80
      %v529 = vpop.permute.xlu0 %528
      %530 = vrot.lane.b32.xlu0 %v194, 80
      %v531 = vpop.permute.xlu0 %530
      %532 = vrot.lane.b32.xlu0 %v196, 80
      %v533 = vpop.permute.xlu0 %532
      %534 = vrot.lane.b32.xlu0 %v198, 80
      %v535 = vpop.permute.xlu0 %534
      %536 = vrot.lane.b32.xlu0 %v200, 80
      %v537 = vpop.permute.xlu0 %536
      %538 = vrot.lane.b32.xlu0 %v202, 80
      %v539 = vpop.permute.xlu0 %538
      %v556 = vadd.f32 %v428, %v509
      %v557 = vadd.f32 %v429, %v511
      %v558 = vadd.f32 %v430, %v513
      %v559 = vadd.f32 %v431, %v515
      %v560 = vadd.f32 %v432, %v517
      %v561 = vadd.f32 %v433, %v519
      %v562 = vadd.f32 %v434, %v521
      %v563 = vadd.f32 %v435, %v523
      %v564 = vadd.f32 %v436, %v525
      %v565 = vadd.f32 %v437, %v527
      %v566 = vadd.f32 %v438, %v529
      %v567 = vadd.f32 %v439, %v531
      %v568 = vadd.f32 %v440, %v533
      %v569 = vadd.f32 %v441, %v535
      %v570 = vadd.f32 %v442, %v537
      %v571 = vadd.f32 %v443, %v539
      %572 = vrot.lane.b32.xlu0 %v204, 80
      %v573 = vpop.permute.xlu0 %572
      %574 = vrot.lane.b32.xlu0 %v205, 80
      %v575 = vpop.permute.xlu0 %574
      %576 = vrot.lane.b32.xlu0 %v206, 80
      %v577 = vpop.permute.xlu0 %576
      %578 = vrot.lane.b32.xlu0 %v207, 80
      %v579 = vpop.permute.xlu0 %578
      %580 = vrot.lane.b32.xlu0 %v208, 80
      %v581 = vpop.permute.xlu0 %580
      %582 = vrot.lane.b32.xlu0 %v209, 80
      %v583 = vpop.permute.xlu0 %582
      %584 = vrot.lane.b32.xlu0 %v210, 80
      %v585 = vpop.permute.xlu0 %584
      %586 = vrot.lane.b32.xlu0 %v211, 80
      %v587 = vpop.permute.xlu0 %586
      %588 = vrot.lane.b32.xlu0 %v212, 80
      %v589 = vpop.permute.xlu0 %588
      %590 = vrot.lane.b32.xlu0 %v213, 80
      %v591 = vpop.permute.xlu0 %590
      %592 = vrot.lane.b32.xlu0 %v214, 80
      %v593 = vpop.permute.xlu0 %592
      %594 = vrot.lane.b32.xlu0 %v215, 80
      %v595 = vpop.permute.xlu0 %594
      %596 = vrot.lane.b32.xlu0 %v216, 80
      %v597 = vpop.permute.xlu0 %596
      %598 = vrot.lane.b32.xlu0 %v217, 80
      %v599 = vpop.permute.xlu0 %598
      %600 = vrot.lane.b32.xlu0 %v218, 80
      %v601 = vpop.permute.xlu0 %600
      %602 = vrot.lane.b32.xlu0 %v219, 80
      %v603 = vpop.permute.xlu0 %602
      %v620 = vadd.f32 %v492, %v573
      %v621 = vadd.f32 %v493, %v575
      %v622 = vadd.f32 %v494, %v577
      %v623 = vadd.f32 %v495, %v579
      %v624 = vadd.f32 %v496, %v581
      %v625 = vadd.f32 %v497, %v583
      %v626 = vadd.f32 %v498, %v585
      %v627 = vadd.f32 %v499, %v587
      %v628 = vadd.f32 %v500, %v589
      %v629 = vadd.f32 %v501, %v591
      %v630 = vadd.f32 %v502, %v593
      %v631 = vadd.f32 %v503, %v595
      %v632 = vadd.f32 %v504, %v597
      %v633 = vadd.f32 %v505, %v599
      %v634 = vadd.f32 %v506, %v601
      %v635 = vadd.f32 %v507, %v603
      %636 = vrot.lane.b32.xlu0 %v172, 64
      %v637 = vpop.permute.xlu0 %636
      %638 = vrot.lane.b32.xlu0 %v174, 64
      %v639 = vpop.permute.xlu0 %638
      %640 = vrot.lane.b32.xlu0 %v176, 64
      %v641 = vpop.permute.xlu0 %640
      %642 = vrot.lane.b32.xlu0 %v178, 64
      %v643 = vpop.permute.xlu0 %642
      %644 = vrot.lane.b32.xlu0 %v180, 64
      %v645 = vpop.permute.xlu0 %644
      %646 = vrot.lane.b32.xlu0 %v182, 64
      %v647 = vpop.permute.xlu0 %646
      %648 = vrot.lane.b32.xlu0 %v184, 64
      %v649 = vpop.permute.xlu0 %648
      %650 = vrot.lane.b32.xlu0 %v186, 64
      %v651 = vpop.permute.xlu0 %650
      %652 = vrot.lane.b32.xlu0 %v188, 64
      %v653 = vpop.permute.xlu0 %652
      %654 = vrot.lane.b32.xlu0 %v190, 64
      %v655 = vpop.permute.xlu0 %654
      %656 = vrot.lane.b32.xlu0 %v192, 64
      %v657 = vpop.permute.xlu0 %656
      %658 = vrot.lane.b32.xlu0 %v194, 64
      %v659 = vpop.permute.xlu0 %658
      %660 = vrot.lane.b32.xlu0 %v196, 64
      %v661 = vpop.permute.xlu0 %660
      %662 = vrot.lane.b32.xlu0 %v198, 64
      %v663 = vpop.permute.xlu0 %662
      %664 = vrot.lane.b32.xlu0 %v200, 64
      %v665 = vpop.permute.xlu0 %664
      %666 = vrot.lane.b32.xlu0 %v202, 64
      %v667 = vpop.permute.xlu0 %666
      %v684 = vadd.f32 %v556, %v637
      %v685 = vadd.f32 %v557, %v639
      %v686 = vadd.f32 %v558, %v641
      %v687 = vadd.f32 %v559, %v643
      %v688 = vadd.f32 %v560, %v645
      %v689 = vadd.f32 %v561, %v647
      %v690 = vadd.f32 %v562, %v649
      %v691 = vadd.f32 %v563, %v651
      %v692 = vadd.f32 %v564, %v653
      %v693 = vadd.f32 %v565, %v655
      %v694 = vadd.f32 %v566, %v657
      %v695 = vadd.f32 %v567, %v659
      %v696 = vadd.f32 %v568, %v661
      %v697 = vadd.f32 %v569, %v663
      %v698 = vadd.f32 %v570, %v665
      %v699 = vadd.f32 %v571, %v667
      %700 = vrot.lane.b32.xlu0 %v204, 64
      %v701 = vpop.permute.xlu0 %700
      %702 = vrot.lane.b32.xlu0 %v205, 64
      %v703 = vpop.permute.xlu0 %702
      %704 = vrot.lane.b32.xlu0 %v206, 64
      %v705 = vpop.permute.xlu0 %704
      %706 = vrot.lane.b32.xlu0 %v207, 64
      %v707 = vpop.permute.xlu0 %706
      %708 = vrot.lane.b32.xlu0 %v208, 64
      %v709 = vpop.permute.xlu0 %708
      %710 = vrot.lane.b32.xlu0 %v209, 64
      %v711 = vpop.permute.xlu0 %710
      %712 = vrot.lane.b32.xlu0 %v210, 64
      %v713 = vpop.permute.xlu0 %712
      %714 = vrot.lane.b32.xlu0 %v211, 64
      %v715 = vpop.permute.xlu0 %714
      %716 = vrot.lane.b32.xlu0 %v212, 64
      %v717 = vpop.permute.xlu0 %716
      %718 = vrot.lane.b32.xlu0 %v213, 64
      %v719 = vpop.permute.xlu0 %718
      %720 = vrot.lane.b32.xlu0 %v214, 64
      %v721 = vpop.permute.xlu0 %720
      %722 = vrot.lane.b32.xlu0 %v215, 64
      %v723 = vpop.permute.xlu0 %722
      %724 = vrot.lane.b32.xlu0 %v216, 64
      %v725 = vpop.permute.xlu0 %724
      %726 = vrot.lane.b32.xlu0 %v217, 64
      %v727 = vpop.permute.xlu0 %726
      %728 = vrot.lane.b32.xlu0 %v218, 64
      %v729 = vpop.permute.xlu0 %728
      %730 = vrot.lane.b32.xlu0 %v219, 64
      %v731 = vpop.permute.xlu0 %730
      %v748 = vadd.f32 %v620, %v701
      %v749 = vadd.f32 %v621, %v703
      %v750 = vadd.f32 %v622, %v705
      %v751 = vadd.f32 %v623, %v707
      %v752 = vadd.f32 %v624, %v709
      %v753 = vadd.f32 %v625, %v711
      %v754 = vadd.f32 %v626, %v713
      %v755 = vadd.f32 %v627, %v715
      %v756 = vadd.f32 %v628, %v717
      %v757 = vadd.f32 %v629, %v719
      %v758 = vadd.f32 %v630, %v721
      %v759 = vadd.f32 %v631, %v723
      %v760 = vadd.f32 %v632, %v725
      %v761 = vadd.f32 %v633, %v727
      %v762 = vadd.f32 %v634, %v729
      %v763 = vadd.f32 %v635, %v731
      %764 = vrot.lane.b32.xlu0 %v172, 48
      %v765 = vpop.permute.xlu0 %764
      %766 = vrot.lane.b32.xlu0 %v174, 48
      %v767 = vpop.permute.xlu0 %766
      %768 = vrot.lane.b32.xlu0 %v176, 48
      %v769 = vpop.permute.xlu0 %768
      %770 = vrot.lane.b32.xlu0 %v178, 48
      %v771 = vpop.permute.xlu0 %770
      %772 = vrot.lane.b32.xlu0 %v180, 48
      %v773 = vpop.permute.xlu0 %772
      %774 = vrot.lane.b32.xlu0 %v182, 48
      %v775 = vpop.permute.xlu0 %774
      %776 = vrot.lane.b32.xlu0 %v184, 48
      %v777 = vpop.permute.xlu0 %776
      %778 = vrot.lane.b32.xlu0 %v186, 48
      %v779 = vpop.permute.xlu0 %778
      %780 = vrot.lane.b32.xlu0 %v188, 48
      %v781 = vpop.permute.xlu0 %780
      %782 = vrot.lane.b32.xlu0 %v190, 48
      %v783 = vpop.permute.xlu0 %782
      %784 = vrot.lane.b32.xlu0 %v192, 48
      %v785 = vpop.permute.xlu0 %784
      %786 = vrot.lane.b32.xlu0 %v194, 48
      %v787 = vpop.permute.xlu0 %786
      %788 = vrot.lane.b32.xlu0 %v196, 48
      %v789 = vpop.permute.xlu0 %788
      %790 = vrot.lane.b32.xlu0 %v198, 48
      %v791 = vpop.permute.xlu0 %790
      %792 = vrot.lane.b32.xlu0 %v200, 48
      %v793 = vpop.permute.xlu0 %792
      %794 = vrot.lane.b32.xlu0 %v202, 48
      %v795 = vpop.permute.xlu0 %794
      %v812 = vadd.f32 %v684, %v765
      %v813 = vadd.f32 %v685, %v767
      %v814 = vadd.f32 %v686, %v769
      %v815 = vadd.f32 %v687, %v771
      %v816 = vadd.f32 %v688, %v773
      %v817 = vadd.f32 %v689, %v775
      %v818 = vadd.f32 %v690, %v777
      %v819 = vadd.f32 %v691, %v779
      %v820 = vadd.f32 %v692, %v781
      %v821 = vadd.f32 %v693, %v783
      %v822 = vadd.f32 %v694, %v785
      %v823 = vadd.f32 %v695, %v787
      %v824 = vadd.f32 %v696, %v789
      %v825 = vadd.f32 %v697, %v791
      %v826 = vadd.f32 %v698, %v793
      %v827 = vadd.f32 %v699, %v795
      %828 = vrot.lane.b32.xlu0 %v204, 48
      %v829 = vpop.permute.xlu0 %828
      %830 = vrot.lane.b32.xlu0 %v205, 48
      %v831 = vpop.permute.xlu0 %830
      %832 = vrot.lane.b32.xlu0 %v206, 48
      %v833 = vpop.permute.xlu0 %832
      %834 = vrot.lane.b32.xlu0 %v207, 48
      %v835 = vpop.permute.xlu0 %834
      %836 = vrot.lane.b32.xlu0 %v208, 48
      %v837 = vpop.permute.xlu0 %836
      %838 = vrot.lane.b32.xlu0 %v209, 48
      %v839 = vpop.permute.xlu0 %838
      %840 = vrot.lane.b32.xlu0 %v210, 48
      %v841 = vpop.permute.xlu0 %840
      %842 = vrot.lane.b32.xlu0 %v211, 48
      %v843 = vpop.permute.xlu0 %842
      %844 = vrot.lane.b32.xlu0 %v212, 48
      %v845 = vpop.permute.xlu0 %844
      %846 = vrot.lane.b32.xlu0 %v213, 48
      %v847 = vpop.permute.xlu0 %846
      %848 = vrot.lane.b32.xlu0 %v214, 48
      %v849 = vpop.permute.xlu0 %848
      %850 = vrot.lane.b32.xlu0 %v215, 48
      %v851 = vpop.permute.xlu0 %850
      %852 = vrot.lane.b32.xlu0 %v216, 48
      %v853 = vpop.permute.xlu0 %852
      %854 = vrot.lane.b32.xlu0 %v217, 48
      %v855 = vpop.permute.xlu0 %854
      %856 = vrot.lane.b32.xlu0 %v218, 48
      %v857 = vpop.permute.xlu0 %856
      %858 = vrot.lane.b32.xlu0 %v219, 48
      %v859 = vpop.permute.xlu0 %858
      %v876 = vadd.f32 %v748, %v829
      %v877 = vadd.f32 %v749, %v831
      %v878 = vadd.f32 %v750, %v833
      %v879 = vadd.f32 %v751, %v835
      %v880 = vadd.f32 %v752, %v837
      %v881 = vadd.f32 %v753, %v839
      %v882 = vadd.f32 %v754, %v841
      %v883 = vadd.f32 %v755, %v843
      %v884 = vadd.f32 %v756, %v845
      %v885 = vadd.f32 %v757, %v847
      %v886 = vadd.f32 %v758, %v849
      %v887 = vadd.f32 %v759, %v851
      %v888 = vadd.f32 %v760, %v853
      %v889 = vadd.f32 %v761, %v855
      %v890 = vadd.f32 %v762, %v857
      %v891 = vadd.f32 %v763, %v859
      %892 = vrot.lane.b32.xlu0 %v172, 32
      %v893 = vpop.permute.xlu0 %892
      %894 = vrot.lane.b32.xlu0 %v174, 32
      %v895 = vpop.permute.xlu0 %894
      %896 = vrot.lane.b32.xlu0 %v176, 32
      %v897 = vpop.permute.xlu0 %896
      %898 = vrot.lane.b32.xlu0 %v178, 32
      %v899 = vpop.permute.xlu0 %898
      %900 = vrot.lane.b32.xlu0 %v180, 32
      %v901 = vpop.permute.xlu0 %900
      %902 = vrot.lane.b32.xlu0 %v182, 32
      %v903 = vpop.permute.xlu0 %902
      %904 = vrot.lane.b32.xlu0 %v184, 32
      %v905 = vpop.permute.xlu0 %904
      %906 = vrot.lane.b32.xlu0 %v186, 32
      %v907 = vpop.permute.xlu0 %906
      %908 = vrot.lane.b32.xlu0 %v188, 32
      %v909 = vpop.permute.xlu0 %908
      %910 = vrot.lane.b32.xlu0 %v190, 32
      %v911 = vpop.permute.xlu0 %910
      %912 = vrot.lane.b32.xlu0 %v192, 32
      %v913 = vpop.permute.xlu0 %912
      %914 = vrot.lane.b32.xlu0 %v194, 32
      %v915 = vpop.permute.xlu0 %914
      %916 = vrot.lane.b32.xlu0 %v196, 32
      %v917 = vpop.permute.xlu0 %916
      %918 = vrot.lane.b32.xlu0 %v198, 32
      %v919 = vpop.permute.xlu0 %918
      %920 = vrot.lane.b32.xlu0 %v200, 32
      %v921 = vpop.permute.xlu0 %920
      %922 = vrot.lane.b32.xlu0 %v202, 32
      %v923 = vpop.permute.xlu0 %922
      %v940 = vadd.f32 %v812, %v893
      %v941 = vadd.f32 %v813, %v895
      %v942 = vadd.f32 %v814, %v897
      %v943 = vadd.f32 %v815, %v899
      %v944 = vadd.f32 %v816, %v901
      %v945 = vadd.f32 %v817, %v903
      %v946 = vadd.f32 %v818, %v905
      %v947 = vadd.f32 %v819, %v907
      %v948 = vadd.f32 %v820, %v909
      %v949 = vadd.f32 %v821, %v911
      %v950 = vadd.f32 %v822, %v913
      %v951 = vadd.f32 %v823, %v915
      %v952 = vadd.f32 %v824, %v917
      %v953 = vadd.f32 %v825, %v919
      %v954 = vadd.f32 %v826, %v921
      %v955 = vadd.f32 %v827, %v923
      %956 = vrot.lane.b32.xlu0 %v204, 32
      %v957 = vpop.permute.xlu0 %956
      %958 = vrot.lane.b32.xlu0 %v205, 32
      %v959 = vpop.permute.xlu0 %958
      %960 = vrot.lane.b32.xlu0 %v206, 32
      %v961 = vpop.permute.xlu0 %960
      %962 = vrot.lane.b32.xlu0 %v207, 32
      %v963 = vpop.permute.xlu0 %962
      %964 = vrot.lane.b32.xlu0 %v208, 32
      %v965 = vpop.permute.xlu0 %964
      %966 = vrot.lane.b32.xlu0 %v209, 32
      %v967 = vpop.permute.xlu0 %966
      %968 = vrot.lane.b32.xlu0 %v210, 32
      %v969 = vpop.permute.xlu0 %968
      %970 = vrot.lane.b32.xlu0 %v211, 32
      %v971 = vpop.permute.xlu0 %970
      %972 = vrot.lane.b32.xlu0 %v212, 32
      %v973 = vpop.permute.xlu0 %972
      %974 = vrot.lane.b32.xlu0 %v213, 32
      %v975 = vpop.permute.xlu0 %974
      %976 = vrot.lane.b32.xlu0 %v214, 32
      %v977 = vpop.permute.xlu0 %976
      %978 = vrot.lane.b32.xlu0 %v215, 32
      %v979 = vpop.permute.xlu0 %978
      %980 = vrot.lane.b32.xlu0 %v216, 32
      %v981 = vpop.permute.xlu0 %980
      %982 = vrot.lane.b32.xlu0 %v217, 32
      %v983 = vpop.permute.xlu0 %982
      %984 = vrot.lane.b32.xlu0 %v218, 32
      %v985 = vpop.permute.xlu0 %984
      %986 = vrot.lane.b32.xlu0 %v219, 32
      %v987 = vpop.permute.xlu0 %986
      %v1004 = vadd.f32 %v876, %v957
      %v1005 = vadd.f32 %v877, %v959
      %v1006 = vadd.f32 %v878, %v961
      %v1007 = vadd.f32 %v879, %v963
      %v1008 = vadd.f32 %v880, %v965
      %v1009 = vadd.f32 %v881, %v967
      %v1010 = vadd.f32 %v882, %v969
      %v1011 = vadd.f32 %v883, %v971
      %v1012 = vadd.f32 %v884, %v973
      %v1013 = vadd.f32 %v885, %v975
      %v1014 = vadd.f32 %v886, %v977
      %v1015 = vadd.f32 %v887, %v979
      %v1016 = vadd.f32 %v888, %v981
      %v1017 = vadd.f32 %v889, %v983
      %v1018 = vadd.f32 %v890, %v985
      %v1019 = vadd.f32 %v891, %v987
      %1020 = vrot.lane.b32.xlu0 %v172, 16
      %v1021 = vpop.permute.xlu0 %1020
      %1022 = vrot.lane.b32.xlu0 %v174, 16
      %v1023 = vpop.permute.xlu0 %1022
      %1024 = vrot.lane.b32.xlu0 %v176, 16
      %v1025 = vpop.permute.xlu0 %1024
      %1026 = vrot.lane.b32.xlu0 %v178, 16
      %v1027 = vpop.permute.xlu0 %1026
      %1028 = vrot.lane.b32.xlu0 %v180, 16
      %v1029 = vpop.permute.xlu0 %1028
      %1030 = vrot.lane.b32.xlu0 %v182, 16
      %v1031 = vpop.permute.xlu0 %1030
      %1032 = vrot.lane.b32.xlu0 %v184, 16
      %v1033 = vpop.permute.xlu0 %1032
      %1034 = vrot.lane.b32.xlu0 %v186, 16
      %v1035 = vpop.permute.xlu0 %1034
      %1036 = vrot.lane.b32.xlu0 %v188, 16
      %v1037 = vpop.permute.xlu0 %1036
      %1038 = vrot.lane.b32.xlu0 %v190, 16
      %v1039 = vpop.permute.xlu0 %1038
      %1040 = vrot.lane.b32.xlu0 %v192, 16
      %v1041 = vpop.permute.xlu0 %1040
      %1042 = vrot.lane.b32.xlu0 %v194, 16
      %v1043 = vpop.permute.xlu0 %1042
      %1044 = vrot.lane.b32.xlu0 %v196, 16
      %v1045 = vpop.permute.xlu0 %1044
      %1046 = vrot.lane.b32.xlu0 %v198, 16
      %v1047 = vpop.permute.xlu0 %1046
      %1048 = vrot.lane.b32.xlu0 %v200, 16
      %v1049 = vpop.permute.xlu0 %1048
      %1050 = vrot.lane.b32.xlu0 %v202, 16
      %v1051 = vpop.permute.xlu0 %1050
      %v1068 = vadd.f32 %v940, %v1021
      %v1069 = vadd.f32 %v941, %v1023
      %v1070 = vadd.f32 %v942, %v1025
      %v1071 = vadd.f32 %v943, %v1027
      %v1072 = vadd.f32 %v944, %v1029
      %v1073 = vadd.f32 %v945, %v1031
      %v1074 = vadd.f32 %v946, %v1033
      %v1075 = vadd.f32 %v947, %v1035
      %v1076 = vadd.f32 %v948, %v1037
      %v1077 = vadd.f32 %v949, %v1039
      %v1078 = vadd.f32 %v950, %v1041
      %v1079 = vadd.f32 %v951, %v1043
      %v1080 = vadd.f32 %v952, %v1045
      %v1081 = vadd.f32 %v953, %v1047
      %v1082 = vadd.f32 %v954, %v1049
      %v1083 = vadd.f32 %v955, %v1051
      %1084 = vrot.lane.b32.xlu0 %v204, 16
      %v1085 = vpop.permute.xlu0 %1084
      %1086 = vrot.lane.b32.xlu0 %v205, 16
      %v1087 = vpop.permute.xlu0 %1086
      %1088 = vrot.lane.b32.xlu0 %v206, 16
      %v1089 = vpop.permute.xlu0 %1088
      %1090 = vrot.lane.b32.xlu0 %v207, 16
      %v1091 = vpop.permute.xlu0 %1090
      %1092 = vrot.lane.b32.xlu0 %v208, 16
      %v1093 = vpop.permute.xlu0 %1092
      %1094 = vrot.lane.b32.xlu0 %v209, 16
      %v1095 = vpop.permute.xlu0 %1094
      %1096 = vrot.lane.b32.xlu0 %v210, 16
      %v1097 = vpop.permute.xlu0 %1096
      %1098 = vrot.lane.b32.xlu0 %v211, 16
      %v1099 = vpop.permute.xlu0 %1098
      %1100 = vrot.lane.b32.xlu0 %v212, 16
      %v1101 = vpop.permute.xlu0 %1100
      %1102 = vrot.lane.b32.xlu0 %v213, 16
      %v1103 = vpop.permute.xlu0 %1102
      %1104 = vrot.lane.b32.xlu0 %v214, 16
      %v1105 = vpop.permute.xlu0 %1104
      %1106 = vrot.lane.b32.xlu0 %v215, 16
      %v1107 = vpop.permute.xlu0 %1106
      %1108 = vrot.lane.b32.xlu0 %v216, 16
      %v1109 = vpop.permute.xlu0 %1108
      %1110 = vrot.lane.b32.xlu0 %v217, 16
      %v1111 = vpop.permute.xlu0 %1110
      %1112 = vrot.lane.b32.xlu0 %v218, 16
      %v1113 = vpop.permute.xlu0 %1112
      %1114 = vrot.lane.b32.xlu0 %v219, 16
      %v1115 = vpop.permute.xlu0 %1114
      %v1132 = vadd.f32 %v1004, %v1085
      %v1133 = vadd.f32 %v1005, %v1087
      %v1134 = vadd.f32 %v1006, %v1089
      %v1135 = vadd.f32 %v1007, %v1091
      %v1136 = vadd.f32 %v1008, %v1093
      %v1137 = vadd.f32 %v1009, %v1095
      %v1138 = vadd.f32 %v1010, %v1097
      %v1139 = vadd.f32 %v1011, %v1099
      %v1140 = vadd.f32 %v1012, %v1101
      %v1141 = vadd.f32 %v1013, %v1103
      %v1142 = vadd.f32 %v1014, %v1105
      %v1143 = vadd.f32 %v1015, %v1107
      %v1144 = vadd.f32 %v1016, %v1109
      %v1145 = vadd.f32 %v1017, %v1111
      %v1146 = vadd.f32 %v1018, %v1113
      %v1147 = vadd.f32 %v1019, %v1115
      %v1148 = vadd.f32 %v1068, %v173
      %v1149 = vadd.f32 %v1069, %v175
      %v1150 = vadd.f32 %v1070, %v177
      %v1151 = vadd.f32 %v1071, %v179
      %v1152 = vadd.f32 %v1072, %v181
      %v1153 = vadd.f32 %v1073, %v183
      %v1154 = vadd.f32 %v1074, %v185
      %v1155 = vadd.f32 %v1075, %v187
      %v1156 = vadd.f32 %v1076, %v189
      %v1157 = vadd.f32 %v1077, %v191
      %v1158 = vadd.f32 %v1078, %v193
      %v1159 = vadd.f32 %v1079, %v195
      %v1160 = vadd.f32 %v1080, %v197
      %v1161 = vadd.f32 %v1081, %v199
      %v1162 = vadd.f32 %v1082, %v201
      %v1163 = vadd.f32 %v1083, %v203
      %v1164 = vmul.f32 %v173, %v173
      %v1165 = vmul.f32 %v175, %v175
      %v1166 = vmul.f32 %v177, %v177
      %v1167 = vmul.f32 %v179, %v179
      %v1168 = vmul.f32 %v181, %v181
      %v1169 = vmul.f32 %v183, %v183
      %v1170 = vmul.f32 %v185, %v185
      %v1171 = vmul.f32 %v187, %v187
      %v1172 = vmul.f32 %v189, %v189
      %v1173 = vmul.f32 %v191, %v191
      %v1174 = vmul.f32 %v193, %v193
      %v1175 = vmul.f32 %v195, %v195
      %v1176 = vmul.f32 %v197, %v197
      %v1177 = vmul.f32 %v199, %v199
      %v1178 = vmul.f32 %v201, %v201
      %v1179 = vmul.f32 %v203, %v203
      %v1180 = vadd.f32 %v1132, %v1164
      %v1181 = vadd.f32 %v1133, %v1165
      %v1182 = vadd.f32 %v1134, %v1166
      %v1183 = vadd.f32 %v1135, %v1167
      %v1184 = vadd.f32 %v1136, %v1168
      %v1185 = vadd.f32 %v1137, %v1169
      %v1186 = vadd.f32 %v1138, %v1170
      %v1187 = vadd.f32 %v1139, %v1171
      %v1188 = vadd.f32 %v1140, %v1172
      %v1189 = vadd.f32 %v1141, %v1173
      %v1190 = vadd.f32 %v1142, %v1174
      %v1191 = vadd.f32 %v1143, %v1175
      %v1192 = vadd.f32 %v1144, %v1176
      %v1193 = vadd.f32 %v1145, %v1177
      %v1194 = vadd.f32 %v1146, %v1178
      %v1195 = vadd.f32 %v1147, %v1179
      %1212 = vrot.lane.b32.xlu0 %v173, 112
      %v1213 = vpop.permute.xlu0 %1212
      %1214 = vrot.lane.b32.xlu0 %v175, 112
      %v1215 = vpop.permute.xlu0 %1214
      %1216 = vrot.lane.b32.xlu0 %v177, 112
      %v1217 = vpop.permute.xlu0 %1216
      %1218 = vrot.lane.b32.xlu0 %v179, 112
      %v1219 = vpop.permute.xlu0 %1218
      %1220 = vrot.lane.b32.xlu0 %v181, 112
      %v1221 = vpop.permute.xlu0 %1220
      %1222 = vrot.lane.b32.xlu0 %v183, 112
      %v1223 = vpop.permute.xlu0 %1222
      %1224 = vrot.lane.b32.xlu0 %v185, 112
      %v1225 = vpop.permute.xlu0 %1224
      %1226 = vrot.lane.b32.xlu0 %v187, 112
      %v1227 = vpop.permute.xlu0 %1226
      %1228 = vrot.lane.b32.xlu0 %v189, 112
      %v1229 = vpop.permute.xlu0 %1228
      %1230 = vrot.lane.b32.xlu0 %v191, 112
      %v1231 = vpop.permute.xlu0 %1230
      %1232 = vrot.lane.b32.xlu0 %v193, 112
      %v1233 = vpop.permute.xlu0 %1232
      %1234 = vrot.lane.b32.xlu0 %v195, 112
      %v1235 = vpop.permute.xlu0 %1234
      %1236 = vrot.lane.b32.xlu0 %v197, 112
      %v1237 = vpop.permute.xlu0 %1236
      %1238 = vrot.lane.b32.xlu0 %v199, 112
      %v1239 = vpop.permute.xlu0 %1238
      %1240 = vrot.lane.b32.xlu0 %v201, 112
      %v1241 = vpop.permute.xlu0 %1240
      %1242 = vrot.lane.b32.xlu0 %v203, 112
      %v1243 = vpop.permute.xlu0 %1242
      %v1260 = vadd.f32 %v1148, %v1213
      %v1261 = vadd.f32 %v1149, %v1215
      %v1262 = vadd.f32 %v1150, %v1217
      %v1263 = vadd.f32 %v1151, %v1219
      %v1264 = vadd.f32 %v1152, %v1221
      %v1265 = vadd.f32 %v1153, %v1223
      %v1266 = vadd.f32 %v1154, %v1225
      %v1267 = vadd.f32 %v1155, %v1227
      %v1268 = vadd.f32 %v1156, %v1229
      %v1269 = vadd.f32 %v1157, %v1231
      %v1270 = vadd.f32 %v1158, %v1233
      %v1271 = vadd.f32 %v1159, %v1235
      %v1272 = vadd.f32 %v1160, %v1237
      %v1273 = vadd.f32 %v1161, %v1239
      %v1274 = vadd.f32 %v1162, %v1241
      %v1275 = vadd.f32 %v1163, %v1243
      %1292 = vrot.lane.b32.xlu0 %v1164, 112
      %v1293 = vpop.permute.xlu0 %1292
      %1294 = vrot.lane.b32.xlu0 %v1165, 112
      %v1295 = vpop.permute.xlu0 %1294
      %1296 = vrot.lane.b32.xlu0 %v1166, 112
      %v1297 = vpop.permute.xlu0 %1296
      %1298 = vrot.lane.b32.xlu0 %v1167, 112
      %v1299 = vpop.permute.xlu0 %1298
      %1300 = vrot.lane.b32.xlu0 %v1168, 112
      %v1301 = vpop.permute.xlu0 %1300
      %1302 = vrot.lane.b32.xlu0 %v1169, 112
      %v1303 = vpop.permute.xlu0 %1302
      %1304 = vrot.lane.b32.xlu0 %v1170, 112
      %v1305 = vpop.permute.xlu0 %1304
      %1306 = vrot.lane.b32.xlu0 %v1171, 112
      %v1307 = vpop.permute.xlu0 %1306
      %1308 = vrot.lane.b32.xlu0 %v1172, 112
      %v1309 = vpop.permute.xlu0 %1308
      %1310 = vrot.lane.b32.xlu0 %v1173, 112
      %v1311 = vpop.permute.xlu0 %1310
      %1312 = vrot.lane.b32.xlu0 %v1174, 112
      %v1313 = vpop.permute.xlu0 %1312
      %1314 = vrot.lane.b32.xlu0 %v1175, 112
      %v1315 = vpop.permute.xlu0 %1314
      %1316 = vrot.lane.b32.xlu0 %v1176, 112
      %v1317 = vpop.permute.xlu0 %1316
      %1318 = vrot.lane.b32.xlu0 %v1177, 112
      %v1319 = vpop.permute.xlu0 %1318
      %1320 = vrot.lane.b32.xlu0 %v1178, 112
      %v1321 = vpop.permute.xlu0 %1320
      %1322 = vrot.lane.b32.xlu0 %v1179, 112
      %v1323 = vpop.permute.xlu0 %1322
      %v1340 = vadd.f32 %v1180, %v1293
      %v1341 = vadd.f32 %v1181, %v1295
      %v1342 = vadd.f32 %v1182, %v1297
      %v1343 = vadd.f32 %v1183, %v1299
      %v1344 = vadd.f32 %v1184, %v1301
      %v1345 = vadd.f32 %v1185, %v1303
      %v1346 = vadd.f32 %v1186, %v1305
      %v1347 = vadd.f32 %v1187, %v1307
      %v1348 = vadd.f32 %v1188, %v1309
      %v1349 = vadd.f32 %v1189, %v1311
      %v1350 = vadd.f32 %v1190, %v1313
      %v1351 = vadd.f32 %v1191, %v1315
      %v1352 = vadd.f32 %v1192, %v1317
      %v1353 = vadd.f32 %v1193, %v1319
      %v1354 = vadd.f32 %v1194, %v1321
      %v1355 = vadd.f32 %v1195, %v1323
      %v1356 = vmul.f32 %v1260, %v1260
      %v1357 = vmul.f32 %v1261, %v1261
      %v1358 = vmul.f32 %v1262, %v1262
      %v1359 = vmul.f32 %v1263, %v1263
      %v1360 = vmul.f32 %v1264, %v1264
      %v1361 = vmul.f32 %v1265, %v1265
      %v1362 = vmul.f32 %v1266, %v1266
      %v1363 = vmul.f32 %v1267, %v1267
      %v1364 = vmul.f32 %v1268, %v1268
      %v1365 = vmul.f32 %v1269, %v1269
      %v1366 = vmul.f32 %v1270, %v1270
      %v1367 = vmul.f32 %v1271, %v1271
      %v1368 = vmul.f32 %v1272, %v1272
      %v1369 = vmul.f32 %v1273, %v1273
      %v1370 = vmul.f32 %v1274, %v1274
      %v1371 = vmul.f32 %v1275, %v1275
      %v1372 = vsub.f32 %v1356, %v1340
      %v1373 = vsub.f32 %v1357, %v1341
      %v1374 = vsub.f32 %v1358, %v1342
      %v1375 = vsub.f32 %v1359, %v1343
      %v1376 = vsub.f32 %v1360, %v1344
      %v1377 = vsub.f32 %v1361, %v1345
      %v1378 = vsub.f32 %v1362, %v1346
      %v1379 = vsub.f32 %v1363, %v1347
      %v1380 = vsub.f32 %v1364, %v1348
      %v1381 = vsub.f32 %v1365, %v1349
      %v1382 = vsub.f32 %v1366, %v1350
      %v1383 = vsub.f32 %v1367, %v1351
      %v1384 = vsub.f32 %v1368, %v1352
      %v1385 = vsub.f32 %v1369, %v1353
      %v1386 = vsub.f32 %v1370, %v1354
      %v1387 = vsub.f32 %v1371, %v1355
      %v1388 = vmul.f32 %v1372, 0.5
      %v1389 = vmul.f32 %v1373, 0.5
      %v1390 = vmul.f32 %v1374, 0.5
      %v1391 = vmul.f32 %v1375, 0.5
      %v1392 = vmul.f32 %v1376, 0.5
      %v1393 = vmul.f32 %v1377, 0.5
      %v1394 = vmul.f32 %v1378, 0.5
      %v1395 = vmul.f32 %v1379, 0.5
      %v1396 = vmul.f32 %v1380, 0.5
      %v1397 = vmul.f32 %v1381, 0.5
      %v1398 = vmul.f32 %v1382, 0.5
      %v1399 = vmul.f32 %v1383, 0.5
      %v1400 = vmul.f32 %v1384, 0.5
      %v1401 = vmul.f32 %v1385, 0.5
      %v1402 = vmul.f32 %v1386, 0.5
      %v1403 = vmul.f32 %v1387, 0.5
      %v1404 = vld [vmem:[%s164] sm:$0xff]
      %v1405 = vld [vmem:[%s164 + $0x8] sm:$0xff]
      %v1406 = vld [vmem:[%s164 + $0x10] sm:$0xff]
      %v1407 = vld [vmem:[%s164 + $0x18] sm:$0xff]
      %v1408 = vld [vmem:[%s164 + $0x20] sm:$0xff]
      %v1409 = vld [vmem:[%s164 + $0x28] sm:$0xff]
      %v1410 = vld [vmem:[%s164 + $0x30] sm:$0xff]
      %v1411 = vld [vmem:[%s164 + $0x38] sm:$0xff]
      %v1412 = vld [vmem:[%s164 + $0x40] sm:$0xff]
      %v1413 = vld [vmem:[%s164 + $0x48] sm:$0xff]
      %v1414 = vld [vmem:[%s164 + $0x50] sm:$0xff]
      %v1415 = vld [vmem:[%s164 + $0x58] sm:$0xff]
      %v1416 = vld [vmem:[%s164 + $0x60] sm:$0xff]
      %v1417 = vld [vmem:[%s164 + $0x68] sm:$0xff]
      %v1418 = vld [vmem:[%s164 + $0x70] sm:$0xff]
      %v1419 = vld [vmem:[%s164 + $0x78] sm:$0xff]
      %1421 = vset.pattern.permute.xlu0 0
      %1422 = vperm.xlu0 %1421, %v1404
      %v1423 = vpop.permute.xlu0 %1422
      %1426 = vset.pattern.permute.xlu0 0
      %1427 = vperm.xlu0 %1426, %v1405
      %v1428 = vpop.permute.xlu0 %1427
      %1431 = vset.pattern.permute.xlu0 0
      %1432 = vperm.xlu0 %1431, %v1406
      %v1433 = vpop.permute.xlu0 %1432
      %1436 = vset.pattern.permute.xlu0 0
      %1437 = vperm.xlu0 %1436, %v1407
      %v1438 = vpop.permute.xlu0 %1437
      %1441 = vset.pattern.permute.xlu0 0
      %1442 = vperm.xlu0 %1441, %v1408
      %v1443 = vpop.permute.xlu0 %1442
      %1446 = vset.pattern.permute.xlu0 0
      %1447 = vperm.xlu0 %1446, %v1409
      %v1448 = vpop.permute.xlu0 %1447
      %1451 = vset.pattern.permute.xlu0 0
      %1452 = vperm.xlu0 %1451, %v1410
      %v1453 = vpop.permute.xlu0 %1452
      %1456 = vset.pattern.permute.xlu0 0
      %1457 = vperm.xlu0 %1456, %v1411
      %v1458 = vpop.permute.xlu0 %1457
      %1461 = vset.pattern.permute.xlu0 0
      %1462 = vperm.xlu0 %1461, %v1412
      %v1463 = vpop.permute.xlu0 %1462
      %1466 = vset.pattern.permute.xlu0 0
      %1467 = vperm.xlu0 %1466, %v1413
      %v1468 = vpop.permute.xlu0 %1467
      %1471 = vset.pattern.permute.xlu0 0
      %1472 = vperm.xlu0 %1471, %v1414
      %v1473 = vpop.permute.xlu0 %1472
      %1476 = vset.pattern.permute.xlu0 0
      %1477 = vperm.xlu0 %1476, %v1415
      %v1478 = vpop.permute.xlu0 %1477
      %1481 = vset.pattern.permute.xlu0 0
      %1482 = vperm.xlu0 %1481, %v1416
      %v1483 = vpop.permute.xlu0 %1482
      %1486 = vset.pattern.permute.xlu0 0
      %1487 = vperm.xlu0 %1486, %v1417
      %v1488 = vpop.permute.xlu0 %1487
      %1491 = vset.pattern.permute.xlu0 0
      %1492 = vperm.xlu0 %1491, %v1418
      %v1493 = vpop.permute.xlu0 %1492
      %1496 = vset.pattern.permute.xlu0 0
      %1497 = vperm.xlu0 %1496, %v1419
      %v1498 = vpop.permute.xlu0 %1497
      %v1500 = vadd.f32 %v1388, %v1423
      %v1501 = vadd.f32 %v1389, %v1428
      %v1502 = vadd.f32 %v1390, %v1433
      %v1503 = vadd.f32 %v1391, %v1438
      %v1504 = vadd.f32 %v1392, %v1443
      %v1505 = vadd.f32 %v1393, %v1448
      %v1506 = vadd.f32 %v1394, %v1453
      %v1507 = vadd.f32 %v1395, %v1458
      %v1508 = vadd.f32 %v1396, %v1463
      %v1509 = vadd.f32 %v1397, %v1468
      %v1510 = vadd.f32 %v1398, %v1473
      %v1511 = vadd.f32 %v1399, %v1478
      %v1512 = vadd.f32 %v1400, %v1483
      %v1513 = vadd.f32 %v1401, %v1488
      %v1514 = vadd.f32 %v1402, %v1493
      %v1515 = vadd.f32 %v1403, %v1498
      %vm1516 = vcmask 130048
      %1517 = vst.msk [vmem:[%s170] sm:$0xff] %vm1516, %v1500
      %1518 = vst.msk [vmem:[%s170 + $0x8] sm:$0xff] %vm1516, %v1501
      %1519 = vst.msk [vmem:[%s170 + $0x10] sm:$0xff] %vm1516, %v1502
      %1520 = vst.msk [vmem:[%s170 + $0x18] sm:$0xff] %vm1516, %v1503
      %1521 = vst.msk [vmem:[%s170 + $0x20] sm:$0xff] %vm1516, %v1504
      %1522 = vst.msk [vmem:[%s170 + $0x28] sm:$0xff] %vm1516, %v1505
      %1523 = vst.msk [vmem:[%s170 + $0x30] sm:$0xff] %vm1516, %v1506
      %1524 = vst.msk [vmem:[%s170 + $0x38] sm:$0xff] %vm1516, %v1507
      %1525 = vst.msk [vmem:[%s170 + $0x40] sm:$0xff] %vm1516, %v1508
      %1526 = vst.msk [vmem:[%s170 + $0x48] sm:$0xff] %vm1516, %v1509
      %1527 = vst.msk [vmem:[%s170 + $0x50] sm:$0xff] %vm1516, %v1510
      %1528 = vst.msk [vmem:[%s170 + $0x58] sm:$0xff] %vm1516, %v1511
      %1529 = vst.msk [vmem:[%s170 + $0x60] sm:$0xff] %vm1516, %v1512
      %1530 = vst.msk [vmem:[%s170 + $0x68] sm:$0xff] %vm1516, %v1513
      %1531 = vst.msk [vmem:[%s170 + $0x70] sm:$0xff] %vm1516, %v1514
      %1532 = vst.msk [vmem:[%s170 + $0x78] sm:$0xff] %vm1516, %v1515
      %s1533 = smul.u32 16, %s13
      %p1534 = scmp.lt.s32.totalorder %s1533, 31
      %s1535 = scalar_select %p1534, %s1533, 31
      %s1536 = smul.addr %s1535, 8
      %s1537 = scalar_lea.vmem %s2, %s1536
      // Predicated region
      $region29: #{fm_forward.1} parent=27 // pred_check
        %p1538 = pneg %p83
      $region30: #{fm_forward.1} parent=27 // pred_check_branch
        %1540 = sbr.rel (%p1538) target = $region32
      $region31: #{fm_forward.1} parent=27 // pred_region
        %s1541 = smul.u32 16, %s13
      $region32: #{fm_forward.1} parent=27 // pred_fallthru
        _
    $region28: #{fm_forward.1} parent=5 // pred_fallthru
      _
    %p1542 = scmp.le.s32.totalorder 2, %s8
    // Predicated region
    $region33: #{fm_forward.1} parent=5 // pred_check
      %p1543 = pneg %p1542
    $region34: #{fm_forward.1} parent=5 // pred_check_branch
      %1545 = sbr.rel (%p1543) target = $region36
    $region35: #{fm_forward.1} parent=5 // pred_region
      %s1546 = ssub.s32 %s8, 2
      // Predicated region
      $region37: #{fm_forward.1} parent=35 // pred_check
        %p1547 = pneg %p89
      $region38: #{fm_forward.1} parent=35 // pred_check_branch
        %1549 = sbr.rel (%p1547) target = $region40
      $region39: #{fm_forward.1} parent=35 // pred_region
        %s1550 = smul.u32 16, %s14
        %p1551 = scmp.lt.s32.totalorder %s1550, 31
        %s1552 = scalar_select %p1551, %s1550, 31
        %s1553 = smul.addr %s1552, 8
        %s1554 = scalar_lea.vmem %s2, %s1553
      $region40: #{fm_forward.1} parent=35 // pred_fallthru
        _
    $region36: #{fm_forward.1} parent=5 // pred_fallthru
      _
  $region6: #{fm_forward.1} parent=0 // loop_footer
    %s12 = sadd.s32 1, %s8
  $region7: #{fm_forward.1} parent=0 // loop_footer_branch
    %7 = sbr.rel target = $region3
  $region8: #{fm_forward.1} parent=0 // loop_exit
    _

</llo_original>
